<compile_context>
chip_gen: v7x
topology: tpu7x:2x2x1
jax: 0.10.0
libtpu: 0.0.40
codegen_flags: <defaults>
</compile_context>

<pallas_src>
import functools

import jax
import jax.numpy as jnp
from jax.experimental import pallas as pl
from jax.experimental.pallas import tpu as pltpu

_NEG_BIG = -1e30              # finite "-inf": keeps exp()/max() NaN-free
_MAX_SINGLE_TILE_ROWS = 1024
_TILE_CANDIDATES = (1024, 512, 256)
_VMEM_BUDGET = 40 << 20       # headroom inside v7x's 64 MiB physical VMEM
_VMEM_FLOOR = 32 << 20        # v5e scoped default is 16 MiB; always raise it
_VMEM_CAP = 64 << 20


def _cdiv(a, b):
    return -(-a // b)


def _estimate_vmem_bytes(tile_n, num_tiles, L, D, x_itemsize, mxu_itemsize):
    """Rough per-call VMEM footprint: double-buffered blocks + scratch + temps."""
    x_tile = 2 * tile_n * L * x_itemsize                     # pipelined x tile
    weights = 2 * (L * D * mxu_itemsize + D * 4)             # resident w1 / w2 row
    outs = 2 * (L * 4 + tile_n * 4 + num_tiles * tile_n * 4)
    scratch = (2 + L + num_tiles * tile_n) * 4
    temps = tile_n * L * mxu_itemsize + tile_n * D * 4 + 4 * tile_n * 4
    return x_tile + weights + outs + scratch + temps


def _choose_tiling(N, L, D, x_itemsize, mxu_itemsize):
    """Pick the largest N-row tile that fits the VMEM budget + a vmem limit."""
    cands = ([N] if N <= _MAX_SINGLE_TILE_ROWS else []) + \
            [c for c in _TILE_CANDIDATES if c < N]
    tile_n = cands[-1]
    for c in cands:
        if _estimate_vmem_bytes(c, _cdiv(N, c), L, D,
                                x_itemsize, mxu_itemsize) <= _VMEM_BUDGET:
            tile_n = c
            break
    num_tiles = _cdiv(N, tile_n)
    est = _estimate_vmem_bytes(tile_n, num_tiles, L, D, x_itemsize, mxu_itemsize)
    vmem_limit = int(min(_VMEM_CAP, max(_VMEM_FLOOR, 3 * est // 2)))
    return tile_n, num_tiles, vmem_limit


def _attn_pool_kernel(x_ref, w1_ref, w2r_ref, out_ref, sraw_ref, a_ref,
                      m_scr, l_scr, acc_scr, s_scr, *, n_real, mask_tail,
                      mxu_dtype):
    """One N-row tile of attention-MIL pooling with an online softmax."""
    i = pl.program_id(0)
    n_tiles = pl.num_programs(0)
    tile_n = x_ref.shape[0]

    @pl.when(i == 0)
    def _init():
        m_scr[...] = jnp.full(m_scr.shape, _NEG_BIG, m_scr.dtype)
        l_scr[...] = jnp.zeros(l_scr.shape, l_scr.dtype)
        acc_scr[...] = jnp.zeros(acc_scr.shape, acc_scr.dtype)

    x = x_ref[...]                                              # (TN, L)
    if mask_tail:
        # x is NOT padded in HBM: the tail tile reads past row N and may hold
        # arbitrary (even NaN/Inf) bits. Zero the garbage rows before any
        # matmul can touch them.
        row = i * tile_n + jax.lax.broadcasted_iota(jnp.int32, (tile_n, 1), 0)
        x = jnp.where(row < n_real, x, 0)
    x_mx = x.astype(mxu_dtype)        # cast once; reused by BOTH matmuls below

    # ---- attention head ----------------------------------------------------
    h = jnp.dot(x_mx, w1_ref[...], preferred_element_type=jnp.float32)  # (TN,D)
    h = jnp.maximum(h, 0.0)                                             # ReLU
    # 2nd linear folded into a lane-dense score ROW: (1,D)·(TN,D)^T -> (1,TN).
    s_row = jax.lax.dot_general(
        w2r_ref[...], h, dimension_numbers=(((1,), (1,)), ((), ())),
        preferred_element_type=jnp.float32)                             # (1,TN)
    if mask_tail:
        col = i * tile_n + jax.lax.broadcasted_iota(jnp.int32, (1, tile_n), 1)
        s_row = jnp.where(col < n_real, s_row, _NEG_BIG)

    sraw_ref[...] = s_row               # raw scores, lane-dense, pipelined out
    s_scr[pl.ds(i, 1), :] = s_row       # keep the full row for fused softmax

    # ---- online softmax + pooled accumulator -------------------------------
    m_prev = m_scr[...]                                                 # (1,1)
    m_new = jnp.maximum(m_prev, jnp.max(s_row, axis=-1, keepdims=True))
    alpha = jnp.exp(m_prev - m_new)
    p_row = jnp.exp(s_row - m_new)                                      # (1,TN)
    l_scr[...] = alpha * l_scr[...] + jnp.sum(p_row, axis=-1, keepdims=True)
    # Pooling on the MXU, reusing the mxu-dtype x tile (no f32 tile copy).
    acc_scr[...] = alpha * acc_scr[...] + jnp.dot(
        p_row.astype(mxu_dtype), x_mx, preferred_element_type=jnp.float32)
    m_scr[...] = m_new

    @pl.when(i == n_tiles - 1)
    def _finalize():
        l = l_scr[...]                      # exact division: runs once per call
        out_ref[...] = (acc_scr[...] / l).astype(out_ref.dtype)
        # Fused softmax of the stored score row; padded slots hold -1e30 -> 0.
        a_ref[...] = jnp.exp(s_scr[...] - m_scr[...]) / l


def attention_forward(x, w1, w2, no_norm=False, mxu_dtype=jnp.bfloat16):
    """Attention-MIL pooling forward.

    x:  (N, L) instance features. Pass bf16 x where the pipeline allows -- the
        kernel is HBM-bandwidth-bound on x and reads it as stored (no wrapper
        cast is performed here).
    w1: (L, D) first attention linear (transposed vs. nn.Linear.weight).
    w2: (D, 1) second attention linear (K == 1, as in the module).
    Returns (pooled (1, L) in x.dtype, attention (1, N) in f32): raw scores if
    no_norm else softmax weights, matching the PyTorch module.
    Pass mxu_dtype=jnp.float32 to disable the bf16 MXU fast path.
    """
    N, L = x.shape
    D = w1.shape[1]
    assert w1.shape == (L, D) and w2.shape == (D, 1) and N >= 1

    x_itemsize = jnp.dtype(x.dtype).itemsize
    mxu_itemsize = jnp.dtype(mxu_dtype).itemsize
    tile_n, num_tiles, vmem_limit = _choose_tiling(N, L, D, x_itemsize,
                                                   mxu_itemsize)
    n_pad = num_tiles * tile_n

    w1_mx = w1.astype(mxu_dtype)                  # tiny, resident; cast once
    w2r = w2.reshape(1, D).astype(jnp.float32)    # (1, D) row; scores stay f32

    kernel = functools.partial(_attn_pool_kernel, n_real=N,
                               mask_tail=(n_pad != N), mxu_dtype=mxu_dtype)

    out, s_raw, a_norm = pl.pallas_call(
        kernel,
        out_shape=(
            jax.ShapeDtypeStruct((1, L), x.dtype),                  # pooled
            jax.ShapeDtypeStruct((1, n_pad), jnp.float32),          # raw scores
            jax.ShapeDtypeStruct((num_tiles, tile_n), jnp.float32), # softmax(A)
        ),
        grid_spec=pltpu.PrefetchScalarGridSpec(
            num_scalar_prefetch=0,
            grid=(num_tiles,),
            in_specs=[
                pl.BlockSpec((tile_n, L), lambda i: (i, 0)),   # x tile (pipelined)
                pl.BlockSpec((L, D), lambda i: (0, 0)),        # w1 resident
                pl.BlockSpec((1, D), lambda i: (0, 0)),        # w2 row resident
            ],
            out_specs=(
                pl.BlockSpec((1, L), lambda i: (0, 0)),              # pooled
                pl.BlockSpec((1, tile_n), lambda i: (0, i)),         # raw scores
                pl.BlockSpec((num_tiles, tile_n), lambda i: (0, 0)), # A (finalize)
            ),
            scratch_shapes=[
                pltpu.VMEM((1, 1), jnp.float32),                 # running max
                pltpu.VMEM((1, 1), jnp.float32),                 # running denom
                pltpu.VMEM((1, L), jnp.float32),                 # running weighted sum
                pltpu.VMEM((num_tiles, tile_n), jnp.float32),    # full score row
            ],
        ),
        compiler_params=pltpu.CompilerParams(
            dimension_semantics=("arbitrary",),
            vmem_limit_bytes=vmem_limit,
        ),
    )(x, w1_mx, w2r)

    if no_norm:
        return out, s_raw[:, :N]
    # (num_tiles, tile_n) -> (1, n_pad) is a free row-major reshape; the slice
    # drops the masked tail columns (exp(-1e30) == 0 there anyway).
    return out, a_norm.reshape(1, n_pad)[:, :N]


def _reference(x, w1, w2, no_norm=False):
    xf = x.astype(jnp.float32)
    h = jnp.maximum(xf @ w1, 0.0)
    s = (h @ w2).T                      # (1, N)
    a = jax.nn.softmax(s, axis=-1)
    out = a @ xf
    return (out, s) if no_norm else (out, a)


if __name__ == "__main__":
    key = jax.random.PRNGKey(0)
    kx, k1, k2, kx2, kx3 = jax.random.split(key, 5)

    # Module-consistent small sizes: input_dim L=256, D=128, K=1.
    L, D = 256, 128
    w1 = jax.random.normal(k1, (L, D), dtype=jnp.float32) * (1.0 / jnp.sqrt(L))
    w2 = jax.random.normal(k2, (D, 1), dtype=jnp.float32) * (1.0 / jnp.sqrt(D))

    # --- case 1: tiny bag (N=8), f32 x; f32 and bf16 MXU paths ---------------
    x = jax.random.normal(kx, (8, L), dtype=jnp.float32)
    ref_out, ref_a = _reference(x, w1, w2, no_norm=False)
    _, ref_a_raw = _reference(x, w1, w2, no_norm=True)

    out32, a32 = attention_forward(x, w1, w2, no_norm=False, mxu_dtype=jnp.float32)
    out32_nn, a_raw32 = attention_forward(x, w1, w2, no_norm=True, mxu_dtype=jnp.float32)
    jax.block_until_ready((out32, a32, out32_nn, a_raw32))
    assert out32.shape == (1, L) and a32.shape == (1, 8) and a_raw32.shape == (1, 8)
    assert jnp.allclose(out32, ref_out, atol=1e-2, rtol=1e-2)
    assert jnp.allclose(a32, ref_a, atol=1e-3, rtol=1e-2)
    assert jnp.allclose(a_raw32, ref_a_raw, atol=1e-2, rtol=1e-2)
    assert jnp.allclose(out32_nn, ref_out, atol=1e-2, rtol=1e-2)

    out_bf, a_bf = attention_forward(x, w1, w2, no_norm=False)   # bf16 MXU path
    jax.block_until_ready((out_bf, a_bf))
    assert jnp.allclose(out_bf, ref_out, atol=5e-2, rtol=5e-2)
    assert jnp.allclose(a_bf, ref_a, atol=5e-2, rtol=5e-2)

    # --- case 2: multi-tile bag with a partial (OOB-masked) tail -------------
    xl = jax.random.normal(kx2, (1300, L), dtype=jnp.float32)
    ref_out_l, ref_a_l = _reference(xl, w1, w2, no_norm=False)
    out_l, a_l = attention_forward(xl, w1, w2, no_norm=False, mxu_dtype=jnp.float32)
    jax.block_until_ready((out_l, a_l))
    assert out_l.shape == (1, L) and a_l.shape == (1, 1300)
    assert bool(jnp.all(jnp.isfinite(out_l))) and bool(jnp.all(jnp.isfinite(a_l)))
    assert jnp.allclose(out_l, ref_out_l, atol=2e-2, rtol=2e-2)
    assert jnp.allclose(a_l, ref_a_l, atol=5e-4, rtol=5e-2)

    # --- case 3: bf16 x in HBM (bandwidth-friendly contract), N=12 -----------
    xb = jax.random.normal(kx3, (12, L), dtype=jnp.float32)
    ref_out_b, ref_a_b = _reference(xb, w1, w2, no_norm=False)
    out_b, a_b = attention_forward(xb.astype(jnp.bfloat16), w1, w2, no_norm=False)
    jax.block_until_ready((out_b, a_b))
    assert out_b.shape == (1, L) and a_b.shape == (1, 12)
    assert jnp.allclose(out_b.astype(jnp.float32), ref_out_b, atol=5e-2, rtol=5e-2)
    assert jnp.allclose(a_b, ref_a_b, atol=5e-2, rtol=5e-2)

    print("KERNEL_OK")
</pallas_src>

<mosaic_0001>
module attributes {stable_mosaic.version = 11 : i64} {
  func.func @_attn_pool_kernel(%arg0: i32, %arg1: memref<8x256xf32, #tpu.memory_space<vmem>>, %arg2: memref<256x128xf32, #tpu.memory_space<vmem>>, %arg3: memref<1x128xf32, #tpu.memory_space<vmem>>, %arg4: memref<1x256xf32, #tpu.memory_space<vmem>>, %arg5: memref<1x8xf32, #tpu.memory_space<vmem>>, %arg6: memref<1x8xf32, #tpu.memory_space<vmem>>, %arg7: memref<1x1xf32, #tpu.memory_space<vmem>>, %arg8: memref<1x1xf32, #tpu.memory_space<vmem>>, %arg9: memref<1x256xf32, #tpu.memory_space<vmem>>, %arg10: memref<1x8xf32, #tpu.memory_space<vmem>>) attributes {dimension_semantics = [#tpu.dimension_semantics<arbitrary>], iteration_bounds = array<i64: 1>, scalar_prefetch = 0 : i64, scratch_operands = 4 : i64, tpu.core_type = #tpu.core_type<tc>, window_params = [{transform_indices = @transform_0, window_bounds = array<i64: 8, 256>}, {pipeline_mode = #tpu.pipeline_mode<synchronous>, transform_indices = @transform_1, window_bounds = array<i64: 256, 128>}, {pipeline_mode = #tpu.pipeline_mode<synchronous>, transform_indices = @transform_2, window_bounds = array<i64: 1, 128>}, {pipeline_mode = #tpu.pipeline_mode<synchronous>, transform_indices = @transform_3, window_bounds = array<i64: 1, 256>}, {transform_indices = @transform_4, window_bounds = array<i64: 1, 8>}, {pipeline_mode = #tpu.pipeline_mode<synchronous>, transform_indices = @transform_5, window_bounds = array<i64: 1, 8>}]} {
    %c0_i32 = arith.constant 0 : i32
    %0 = arith.cmpi eq, %arg0, %c0_i32 : i32
    %1 = arith.extui %0 : i1 to i32
    %c0_i32_0 = arith.constant 0 : i32
    %2 = arith.cmpi ne, %1, %c0_i32_0 : i32
    scf.if %2 {
      %cst_28 = arith.constant -1.000000e+30 : f32
      %38 = vector.broadcast %cst_28 : f32 to vector<1x1xf32>
      %c0_29 = arith.constant 0 : index
      %c0_30 = arith.constant 0 : index
      %39 = vector.load %arg7[%c0_29, %c0_30] : memref<1x1xf32, #tpu.memory_space<vmem>>, vector<1x1xf32>
      tpu.vector_store %arg7[%c0_29, %c0_30], %38 {strides = array<i32>} : memref<1x1xf32, #tpu.memory_space<vmem>>, vector<1x1xf32>,
      %cst_31 = arith.constant 0.000000e+00 : f32
      %40 = vector.broadcast %cst_31 : f32 to vector<1x1xf32>
      %c0_32 = arith.constant 0 : index
      %c0_33 = arith.constant 0 : index
      %41 = vector.load %arg8[%c0_32, %c0_33] : memref<1x1xf32, #tpu.memory_space<vmem>>, vector<1x1xf32>
      tpu.vector_store %arg8[%c0_32, %c0_33], %40 {strides = array<i32>} : memref<1x1xf32, #tpu.memory_space<vmem>>, vector<1x1xf32>,
      %cst_34 = arith.constant 0.000000e+00 : f32
      %42 = vector.broadcast %cst_34 : f32 to vector<1x256xf32>
      %c0_35 = arith.constant 0 : index
      %c0_36 = arith.constant 0 : index
      %43 = vector.load %arg9[%c0_35, %c0_36] : memref<1x256xf32, #tpu.memory_space<vmem>>, vector<1x256xf32>
      tpu.vector_store %arg9[%c0_35, %c0_36], %42 {strides = array<i32>} : memref<1x256xf32, #tpu.memory_space<vmem>>, vector<1x256xf32>,
    } else {
    }
    %c0 = arith.constant 0 : index
    %c0_1 = arith.constant 0 : index
    %3 = vector.load %arg1[%c0, %c0_1] : memref<8x256xf32, #tpu.memory_space<vmem>>, vector<8x256xf32>
    %c0_2 = arith.constant 0 : index
    %c0_3 = arith.constant 0 : index
    %4 = vector.load %arg2[%c0_2, %c0_3] : memref<256x128xf32, #tpu.memory_space<vmem>>, vector<256x128xf32>
    %cst = arith.constant dense<0.000000e+00> : vector<8x128xf32>
    %5 = tpu.matmul %3, %4, %cst {dimension_numbers = #tpu.dot_dimension_numbers<[1], [0], [0], [1], [0, 0, 1, 1], [], []>} : vector<8x256xf32>, vector<256x128xf32>, vector<8x128xf32> -> vector<8x128xf32>
    %cst_4 = arith.constant 0.000000e+00 : f32
    %6 = vector.broadcast %cst_4 : f32 to vector<8x128xf32>
    %7 = arith.maximumf %5, %6 : vector<8x128xf32>
    %c0_5 = arith.constant 0 : index
    %c0_6 = arith.constant 0 : index
    %8 = vector.load %arg3[%c0_5, %c0_6] : memref<1x128xf32, #tpu.memory_space<vmem>>, vector<1x128xf32>
    %cst_7 = arith.constant dense<0.000000e+00> : vector<1x8xf32>
    %9 = tpu.matmul %8, %7, %cst_7 {dimension_numbers = #tpu.dot_dimension_numbers<[1], [1], [0], [0], [0, 0, 1, 0], [], []>} : vector<1x128xf32>, vector<8x128xf32>, vector<1x8xf32> -> vector<1x8xf32>
    %c0_8 = arith.constant 0 : index
    %c0_9 = arith.constant 0 : index
    %10 = vector.load %arg5[%c0_8, %c0_9] : memref<1x8xf32, #tpu.memory_space<vmem>>, vector<1x8xf32>
    tpu.vector_store %arg5[%c0_8, %c0_9], %9 {strides = array<i32>} : memref<1x8xf32, #tpu.memory_space<vmem>>, vector<1x8xf32>,
    %11 = arith.index_cast %arg0 : i32 to index
    %c0_10 = arith.constant 0 : index
    %12 = vector.load %arg10[%11, %c0_10] : memref<1x8xf32, #tpu.memory_space<vmem>>, vector<1x8xf32>
    tpu.vector_store %arg10[%11, %c0_10], %9 {strides = array<i32>} : memref<1x8xf32, #tpu.memory_space<vmem>>, vector<1x8xf32>,
    %c0_11 = arith.constant 0 : index
    %c0_12 = arith.constant 0 : index
    %13 = vector.load %arg7[%c0_11, %c0_12] : memref<1x1xf32, #tpu.memory_space<vmem>>, vector<1x1xf32>
    %cst_13 = arith.constant dense<0xFF800000> : vector<1xf32>
    %14 = vector.multi_reduction <maximumf>, %9, %cst_13 [1] : vector<1x8xf32> to vector<1xf32>
    %15 = vector.shape_cast %14 : vector<1xf32> to vector<1x1xf32>
    %16 = arith.maximumf %13, %15 : vector<1x1xf32>
    %17 = arith.subf %13, %16 : vector<1x1xf32>
    %18 = math.exp %17 : vector<1x1xf32>
    %19 = vector.broadcast %16 : vector<1x1xf32> to vector<1x8xf32>
    %20 = arith.subf %9, %19 : vector<1x8xf32>
    %21 = math.exp %20 : vector<1x8xf32>
    %c0_14 = arith.constant 0 : index
    %c0_15 = arith.constant 0 : index
    %22 = vector.load %arg8[%c0_14, %c0_15] : memref<1x1xf32, #tpu.memory_space<vmem>>, vector<1x1xf32>
    %23 = arith.mulf %18, %22 : vector<1x1xf32>
    %cst_16 = arith.constant dense<0.000000e+00> : vector<1xf32>
    %24 = vector.multi_reduction <add>, %21, %cst_16 [1] : vector<1x8xf32> to vector<1xf32>
    %25 = vector.shape_cast %24 : vector<1xf32> to vector<1x1xf32>
    %26 = arith.addf %23, %25 : vector<1x1xf32>
    %c0_17 = arith.constant 0 : index
    %c0_18 = arith.constant 0 : index
    %27 = vector.load %arg8[%c0_17, %c0_18] : memref<1x1xf32, #tpu.memory_space<vmem>>, vector<1x1xf32>
    tpu.vector_store %arg8[%c0_17, %c0_18], %26 {strides = array<i32>} : memref<1x1xf32, #tpu.memory_space<vmem>>, vector<1x1xf32>,
    %c0_19 = arith.constant 0 : index
    %c0_20 = arith.constant 0 : index
    %28 = vector.load %arg9[%c0_19, %c0_20] : memref<1x256xf32, #tpu.memory_space<vmem>>, vector<1x256xf32>
    %29 = vector.broadcast %18 : vector<1x1xf32> to vector<1x256xf32>
    %30 = arith.mulf %29, %28 : vector<1x256xf32>
    %cst_21 = arith.constant dense<0.000000e+00> : vector<1x256xf32>
    %31 = tpu.matmul %21, %3, %cst_21 {dimension_numbers = #tpu.dot_dimension_numbers<[1], [0], [0], [1], [0, 0, 1, 1], [], []>} : vector<1x8xf32>, vector<8x256xf32>, vector<1x256xf32> -> vector<1x256xf32>
    %32 = arith.addf %30, %31 : vector<1x256xf32>
    %c0_22 = arith.constant 0 : index
    %c0_23 = arith.constant 0 : index
    %33 = vector.load %arg9[%c0_22, %c0_23] : memref<1x256xf32, #tpu.memory_space<vmem>>, vector<1x256xf32>
    tpu.vector_store %arg9[%c0_22, %c0_23], %32 {strides = array<i32>} : memref<1x256xf32, #tpu.memory_space<vmem>>, vector<1x256xf32>,
    %c0_24 = arith.constant 0 : index
    %c0_25 = arith.constant 0 : index
    %34 = vector.load %arg7[%c0_24, %c0_25] : memref<1x1xf32, #tpu.memory_space<vmem>>, vector<1x1xf32>
    tpu.vector_store %arg7[%c0_24, %c0_25], %16 {strides = array<i32>} : memref<1x1xf32, #tpu.memory_space<vmem>>, vector<1x1xf32>,
    %c0_i32_26 = arith.constant 0 : i32
    %35 = arith.cmpi eq, %arg0, %c0_i32_26 : i32
    %36 = arith.extui %35 : i1 to i32
    %c0_i32_27 = arith.constant 0 : i32
    %37 = arith.cmpi ne, %36, %c0_i32_27 : i32
    scf.if %37 {
      %c0_28 = arith.constant 0 : index
      %c0_29 = arith.constant 0 : index
      %38 = vector.load %arg8[%c0_28, %c0_29] : memref<1x1xf32, #tpu.memory_space<vmem>>, vector<1x1xf32>
      %c0_30 = arith.constant 0 : index
      %c0_31 = arith.constant 0 : index
      %39 = vector.load %arg9[%c0_30, %c0_31] : memref<1x256xf32, #tpu.memory_space<vmem>>, vector<1x256xf32>
      %40 = vector.broadcast %38 : vector<1x1xf32> to vector<1x256xf32>
      %41 = arith.divf %39, %40 : vector<1x256xf32>
      %c0_32 = arith.constant 0 : index
      %c0_33 = arith.constant 0 : index
      %42 = vector.load %arg4[%c0_32, %c0_33] : memref<1x256xf32, #tpu.memory_space<vmem>>, vector<1x256xf32>
      tpu.vector_store %arg4[%c0_32, %c0_33], %41 {strides = array<i32>} : memref<1x256xf32, #tpu.memory_space<vmem>>, vector<1x256xf32>,
      %c0_34 = arith.constant 0 : index
      %c0_35 = arith.constant 0 : index
      %43 = vector.load %arg10[%c0_34, %c0_35] : memref<1x8xf32, #tpu.memory_space<vmem>>, vector<1x8xf32>
      %c0_36 = arith.constant 0 : index
      %c0_37 = arith.constant 0 : index
      %44 = vector.load %arg7[%c0_36, %c0_37] : memref<1x1xf32, #tpu.memory_space<vmem>>, vector<1x1xf32>
      %45 = vector.broadcast %44 : vector<1x1xf32> to vector<1x8xf32>
      %46 = arith.subf %43, %45 : vector<1x8xf32>
      %47 = math.exp %46 : vector<1x8xf32>
      %48 = vector.broadcast %38 : vector<1x1xf32> to vector<1x8xf32>
      %49 = arith.divf %47, %48 : vector<1x8xf32>
      %c0_38 = arith.constant 0 : index
      %c0_39 = arith.constant 0 : index
      %50 = vector.load %arg6[%c0_38, %c0_39] : memref<1x8xf32, #tpu.memory_space<vmem>>, vector<1x8xf32>
      tpu.vector_store %arg6[%c0_38, %c0_39], %49 {strides = array<i32>} : memref<1x8xf32, #tpu.memory_space<vmem>>, vector<1x8xf32>,
    } else {
    }
    return
  }
  func.func @transform_0(%arg0: i32) -> (i32, i32) {
    %c0_i32 = arith.constant 0 : i32
    %c0_i32_0 = arith.constant 0 : i32
    return %arg0, %c0_i32 : i32, i32
  }
  func.func @transform_1(%arg0: i32) -> (i32, i32) {
    %c0_i32 = arith.constant 0 : i32
    %c0_i32_0 = arith.constant 0 : i32
    %c0_i32_1 = arith.constant 0 : i32
    return %c0_i32, %c0_i32_0 : i32, i32
  }
  func.func @transform_2(%arg0: i32) -> (i32, i32) {
    %c0_i32 = arith.constant 0 : i32
    %c0_i32_0 = arith.constant 0 : i32
    %c0_i32_1 = arith.constant 0 : i32
    return %c0_i32, %c0_i32_0 : i32, i32
  }
  func.func @transform_3(%arg0: i32) -> (i32, i32) {
    %c0_i32 = arith.constant 0 : i32
    %c0_i32_0 = arith.constant 0 : i32
    %c0_i32_1 = arith.constant 0 : i32
    return %c0_i32, %c0_i32_0 : i32, i32
  }
  func.func @transform_4(%arg0: i32) -> (i32, i32) {
    %c0_i32 = arith.constant 0 : i32
    %c0_i32_0 = arith.constant 0 : i32
    return %c0_i32, %arg0 : i32, i32
  }
  func.func @transform_5(%arg0: i32) -> (i32, i32) {
    %c0_i32 = arith.constant 0 : i32
    %c0_i32_0 = arith.constant 0 : i32
    %c0_i32_1 = arith.constant 0 : i32
    return %c0_i32, %c0_i32_0 : i32, i32
  }
}

</mosaic_0001>

<llo_original>
// kernel: tpu_custom_call.1
$region0: #{tpu_custom_call.1}
  #allocation0 [shape = 'u32[]', space=smem, size = 0x4, offset = 0x4, fixed_abs, tag = 'smem constant byte address 0x4 - core index']
  #allocation1 [shape = 'u32[144,128]{1,0:T(1,128)}', space=vmem, size = 0x12000, scoped, tag = 'internal scratch']
  #allocation2 [shape = 'f32[1,1]{1,0:T(1,128)}', space=vmem, size = 0x200, scoped, tag = 'scratch operand']
  #allocation3 [shape = 'f32[1,1]{1,0:T(1,128)}', space=vmem, size = 0x200, scoped, tag = 'scratch operand']
  #allocation4 [shape = 'f32[1,256]{1,0:T(1,128)}', space=vmem, size = 0x400, scoped, tag = 'scratch operand']
  #allocation5 [shape = 'f32[1,8]{1,0:T(1,128)}', space=vmem, size = 0x200, scoped, tag = 'scratch operand']
  %s0 = inlined_call_operand.hbm [shape: f32[8,256], index: 0, kind: input, shape index: {}]
  %s1 = inlined_call_operand.hbm [shape: f32[256,128], index: 1, kind: input, shape index: {}]
  %s2 = inlined_call_operand.vmem [shape: f32[1,128], index: 2, kind: input, shape index: {}]
  %s3 = inlined_call_operand.hbm [shape: f32[1,256], index: 3, kind: output, shape index: {0}]
  %s4 = inlined_call_operand.hbm [shape: f32[1,8], index: 4, kind: output, shape index: {1}]
  %s5 = inlined_call_operand.hbm [shape: f32[1,8], index: 5, kind: output, shape index: {2}]
  %6 = xla_tuple %s3, %s4, %s5
  %s7 = sld [smem:[#allocation0]]
  $region54: #{tpu_custom_call.1} parent=0
    _
  %s9 = ssub.s32 1, %s7
  %s10 = scalar_select 0, %s9, %s7
  $region1: #{tpu_custom_call.1} parent=0
    #allocation6 [shape = 'u8[8192]{0}', space=vmem, size = 0x2000, scoped, tag = 'input window, operand 0, single buffered']
    #allocation7 [shape = 's32[1]{0}', space=sflag, size = 0x4, scoped, tag = 'scoped memory for tpu_custom_call.1']
    #allocation8 [shape = 's32[1]{0}', space=sflag, size = 0x4, scoped, tag = 'scoped memory for tpu_custom_call.1']
    #allocation9 [shape = 'u8[131072]{0}', space=vmem, size = 0x20000, scoped, tag = 'input window, operand 1, single buffered']
    #allocation10 [shape = 's32[1]{0}', space=sflag, size = 0x4, scoped, tag = 'scoped memory for tpu_custom_call.1']
    #allocation11 [shape = 'u8[1024]{0}', space=vmem, size = 0x400, scoped, tag = 'output window, operand 0, single buffered']
    #allocation12 [shape = 'u8[512]{0}', space=vmem, size = 0x400, scoped, tag = 'output window, operand 1, single buffered']
    #allocation13 [shape = 's32[1]{0}', space=sflag, size = 0x4, scoped, tag = 'scoped memory for tpu_custom_call.1']
    #allocation14 [shape = 'u8[512]{0}', space=vmem, size = 0x400, scoped, tag = 'output window, operand 2, single buffered']
    %11 = vsyncpa [#allocation7], 0
    %12 = vsyncpa [#allocation10], 0
    %13 = vsyncpa [#allocation8], 0
    %14 = vsyncpa [#allocation13], 0
    // Predicated region
    $region2: #{tpu_custom_call.1} parent=1 // pred_check
      _
    $region3: #{tpu_custom_call.1} parent=1 // pred_check_branch
      %16 = sbr.rel (0) target = $region5
    $region4: #{tpu_custom_call.1} parent=1 // pred_region
      %s18 = ssub.s32 256, 256
      %19 = vsyncadd [#allocation7], %s18
      %s21 = sshll.u32 [#allocation6], 4
      %s22 = int_to_ptr.vmem [resolvable:$true] %s21
      %24 = dma.hbm_to_vmem [thread:$0]  %s0, 256, %s22, [#allocation7]
    $region5: #{tpu_custom_call.1} parent=1 // pred_fallthru
      _
    // Predicated region
    $region6: #{tpu_custom_call.1} parent=1 // pred_check
      _
    $region7: #{tpu_custom_call.1} parent=1 // pred_check_branch
      %26 = sbr.rel (0) target = $region9
    $region8: #{tpu_custom_call.1} parent=1 // pred_region
      %s28 = ssub.s32 4096, 4096
      %29 = vsyncadd [#allocation10], %s28
      %s30 = sshll.u32 [#allocation9], 4
      %s31 = int_to_ptr.vmem [resolvable:$true] %s30
      %36 = dma.hbm_to_vmem [thread:$0]  %s1, 4096, %s31, [#allocation10], 128, 128, 8
    $region9: #{tpu_custom_call.1} parent=1 // pred_fallthru
      _
    // Predicated region
    $region10: #{tpu_custom_call.1} parent=1 // pred_check
      _
    $region11: #{tpu_custom_call.1} parent=1 // pred_check_branch
      %38 = sbr.rel (0) target = $region13
    $region12: #{tpu_custom_call.1} parent=1 // pred_region
      _
    $region13: #{tpu_custom_call.1} parent=1 // pred_fallthru
      _
    // Predicated region
    $region14: #{tpu_custom_call.1} parent=1 // pred_check
      _
    $region15: #{tpu_custom_call.1} parent=1 // pred_check_branch
      %40 = sbr.rel (0) target = $region17
    $region16: #{tpu_custom_call.1} parent=1 // pred_region
      %41 = dma.done [#allocation7], 256
    $region17: #{tpu_custom_call.1} parent=1 // pred_fallthru
      _
    // Predicated region
    $region18: #{tpu_custom_call.1} parent=1 // pred_check
      _
    $region19: #{tpu_custom_call.1} parent=1 // pred_check_branch
      %43 = sbr.rel (0) target = $region21
    $region20: #{tpu_custom_call.1} parent=1 // pred_region
      %44 = dma.done [#allocation10], 4096
    $region21: #{tpu_custom_call.1} parent=1 // pred_fallthru
      _
    %p45 = scmp.eq.s32.totalorder 0, 0
    // Predicated region
    $region22: #{tpu_custom_call.1} parent=1 // pred_check
      %p46 = pneg %p45
    $region23: #{tpu_custom_call.1} parent=1 // pred_check_branch
      %48 = sbr.rel (%p46) target = $region25
    $region24: #{tpu_custom_call.1} parent=1 // pred_region
      %vm49 = vcmask 0
      %50 = vst.msk [vmem:[#allocation2] sm:$0x1] %vm49, -1e+30
      %51 = vst.msk [vmem:[#allocation3] sm:$0x1] %vm49, 0.0
      %v52 = vlaneseq
      %vm53 = vcmp.ge.s32.totalorder %v52, 0
      %vm54 = vcmp.lt.s32.totalorder %v52, 256
      %vm55 = vmand %vm53, %vm54
      %56 = vst.msk [vmem:[#allocation4] sm:$0x3] %vm55, 0.0
    $region25: #{tpu_custom_call.1} parent=1 // pred_fallthru
      _
    %v57 = vld [vmem:[#allocation6] sm:$0xff]
    %v58 = vld [vmem:[#allocation6 + $0x8] sm:$0xff]
    %v59 = vld [vmem:[#allocation9] sm:$0xff]
    %v60 = vld [vmem:[#allocation9 + $0x8] sm:$0xff]
    %v61 = vld [vmem:[#allocation9 + $0x10] sm:$0xff]
    %v62 = vld [vmem:[#allocation9 + $0x18] sm:$0xff]
    %v63 = vld [vmem:[#allocation9 + $0x20] sm:$0xff]
    %v64 = vld [vmem:[#allocation9 + $0x28] sm:$0xff]
    %v65 = vld [vmem:[#allocation9 + $0x30] sm:$0xff]
    %v66 = vld [vmem:[#allocation9 + $0x38] sm:$0xff]
    %v67 = vld [vmem:[#allocation9 + $0x40] sm:$0xff]
    %v68 = vld [vmem:[#allocation9 + $0x48] sm:$0xff]
    %v69 = vld [vmem:[#allocation9 + $0x50] sm:$0xff]
    %v70 = vld [vmem:[#allocation9 + $0x58] sm:$0xff]
    %v71 = vld [vmem:[#allocation9 + $0x60] sm:$0xff]
    %v72 = vld [vmem:[#allocation9 + $0x68] sm:$0xff]
    %v73 = vld [vmem:[#allocation9 + $0x70] sm:$0xff]
    %v74 = vld [vmem:[#allocation9 + $0x78] sm:$0xff]
    %v75 = vld [vmem:[#allocation9 + $0x80] sm:$0xff]
    %v76 = vld [vmem:[#allocation9 + $0x88] sm:$0xff]
    %v77 = vld [vmem:[#allocation9 + $0x90] sm:$0xff]
    %v78 = vld [vmem:[#allocation9 + $0x98] sm:$0xff]
    %v79 = vld [vmem:[#allocation9 + $0xa0] sm:$0xff]
    %v80 = vld [vmem:[#allocation9 + $0xa8] sm:$0xff]
    %v81 = vld [vmem:[#allocation9 + $0xb0] sm:$0xff]
    %v82 = vld [vmem:[#allocation9 + $0xb8] sm:$0xff]
    %v83 = vld [vmem:[#allocation9 + $0xc0] sm:$0xff]
    %v84 = vld [vmem:[#allocation9 + $0xc8] sm:$0xff]
    %v85 = vld [vmem:[#allocation9 + $0xd0] sm:$0xff]
    %v86 = vld [vmem:[#allocation9 + $0xd8] sm:$0xff]
    %v87 = vld [vmem:[#allocation9 + $0xe0] sm:$0xff]
    %v88 = vld [vmem:[#allocation9 + $0xe8] sm:$0xff]
    %v89 = vld [vmem:[#allocation9 + $0xf0] sm:$0xff]
    %v90 = vld [vmem:[#allocation9 + $0xf8] sm:$0xff]
    %91 = vmatprep.subr.mxu0 0.0
    %92 = vmatpush1.msra.mxu0 %v59
    %93 = vmatprep.subr.mxu0 0.0
    %94 = vmatpush1.msra.mxu0 %v60
    %95 = vmatprep.subr.mxu0 0.0
    %96 = vmatpush1.msra.mxu0 %v61
    %97 = vmatprep.subr.mxu0 0.0
    %98 = vmatpush1.msra.mxu0 %v62
    %99 = vmatprep.subr.mxu0 0.0
    %100 = vmatpush1.msra.mxu0 %v63
    %101 = vmatprep.subr.mxu0 0.0
    %102 = vmatpush1.msra.mxu0 %v64
    %103 = vmatprep.subr.mxu0 0.0
    %104 = vmatpush1.msra.mxu0 %v65
    %105 = vmatprep.subr.mxu0 0.0
    %106 = vmatpush1.msra.mxu0 %v66
    %107 = vmatprep.subr.mxu0 0.0
    %108 = vmatpush1.msra.mxu0 %v67
    %109 = vmatprep.subr.mxu0 0.0
    %110 = vmatpush1.msra.mxu0 %v68
    %111 = vmatprep.subr.mxu0 0.0
    %112 = vmatpush1.msra.mxu0 %v69
    %113 = vmatprep.subr.mxu0 0.0
    %114 = vmatpush1.msra.mxu0 %v70
    %115 = vmatprep.subr.mxu0 0.0
    %116 = vmatpush1.msra.mxu0 %v71
    %117 = vmatprep.subr.mxu0 0.0
    %118 = vmatpush1.msra.mxu0 %v72
    %119 = vmatprep.subr.mxu0 0.0
    %120 = vmatpush1.msra.mxu0 %v73
    %121 = vmatprep.subr.mxu0 0.0
    %122 = vmatpush1.msra.mxu0 %v74
    %123 = vmatprep.subr.mxu0 0.0
    %124 = vmatpush1.msra.mxu0 %v75
    %125 = vmatprep.subr.mxu0 0.0
    %126 = vmatpush1.msra.mxu0 %v76
    %127 = vmatprep.subr.mxu0 0.0
    %128 = vmatpush1.msra.mxu0 %v77
    %129 = vmatprep.subr.mxu0 0.0
    %130 = vmatpush1.msra.mxu0 %v78
    %131 = vmatprep.subr.mxu0 0.0
    %132 = vmatpush1.msra.mxu0 %v79
    %133 = vmatprep.subr.mxu0 0.0
    %134 = vmatpush1.msra.mxu0 %v80
    %135 = vmatprep.subr.mxu0 0.0
    %136 = vmatpush1.msra.mxu0 %v81
    %137 = vmatprep.subr.mxu0 0.0
    %138 = vmatpush1.msra.mxu0 %v82
    %139 = vmatprep.subr.mxu0 0.0
    %140 = vmatpush1.msra.mxu0 %v83
    %141 = vmatprep.subr.mxu0 0.0
    %142 = vmatpush1.msra.mxu0 %v84
    %143 = vmatprep.subr.mxu0 0.0
    %144 = vmatpush1.msra.mxu0 %v85
    %145 = vmatprep.subr.mxu0 0.0
    %146 = vmatpush1.msra.mxu0 %v86
    %147 = vmatprep.subr.mxu0 0.0
    %148 = vmatpush1.msra.mxu0 %v87
    %149 = vmatprep.subr.mxu0 0.0
    %150 = vmatpush1.msra.mxu0 %v88
    %151 = vmatprep.subr.mxu0 0.0
    %152 = vmatpush1.msra.mxu0 %v89
    %153 = vmatprep.subr.mxu0 0.0
    %154 = vmatpush1.msra.mxu0 %v90
    %155 = vmatprep.mubr.f32.mxu0 %v58
    %156 = vmatmul.mubr.f32.gmra.mrb[0].mxu0 %v57
    %v157 = vpop.f32.mrb[0].mxu0
    %v158 = vadd.f32 0.0, %v157
    %v159 = vpop.f32.mrb[0].mxu0
    %160 = vdwg.mxu0
    %v161 = vmax.f32 %v158, 0.0
    %v162 = vld [vmem:[%s2] sm:$0x1]
    %163 = vmatprep.subr.mxu0 0.0
    %164 = vmatpush1.xpose.msra.mxu0 %v161
    %165 = vmatprep.subr.mxu0 0.0
    %166 = vmatpush1.xpose.msra.mxu0 0.0
    %167 = vmatprep.subr.mxu0 0.0
    %168 = vmatpush1.xpose.msra.mxu0 0.0
    %169 = vmatprep.subr.mxu0 0.0
    %170 = vmatpush1.xpose.msra.mxu0 0.0
    %171 = vmatprep.subr.mxu0 0.0
    %172 = vmatpush1.xpose.msra.mxu0 0.0
    %173 = vmatprep.subr.mxu0 0.0
    %174 = vmatpush1.xpose.msra.mxu0 0.0
    %175 = vmatprep.subr.mxu0 0.0
    %176 = vmatpush1.xpose.msra.mxu0 0.0
    %177 = vmatprep.subr.mxu0 0.0
    %178 = vmatpush1.xpose.msra.mxu0 0.0
    %179 = vmatprep.subr.mxu0 0.0
    %180 = vmatpush1.xpose.msra.mxu0 0.0
    %181 = vmatprep.subr.mxu0 0.0
    %182 = vmatpush1.xpose.msra.mxu0 0.0
    %183 = vmatprep.subr.mxu0 0.0
    %184 = vmatpush1.xpose.msra.mxu0 0.0
    %185 = vmatprep.subr.mxu0 0.0
    %186 = vmatpush1.xpose.msra.mxu0 0.0
    %187 = vmatprep.subr.mxu0 0.0
    %188 = vmatpush1.xpose.msra.mxu0 0.0
    %189 = vmatprep.subr.mxu0 0.0
    %190 = vmatpush1.xpose.msra.mxu0 0.0
    %191 = vmatprep.subr.mxu0 0.0
    %192 = vmatpush1.xpose.msra.mxu0 0.0
    %193 = vmatprep.subr.mxu0 0.0
    %194 = vmatpush1.xpose.msra.mxu0 0.0
    %195 = vmatprep.subr.mxu0 0.0
    %196 = vmatpush1.xpose.msra.mxu0 0.0
    %197 = vmatprep.subr.mxu0 0.0
    %198 = vmatpush1.xpose.msra.mxu0 0.0
    %199 = vmatprep.subr.mxu0 0.0
    %200 = vmatpush1.xpose.msra.mxu0 0.0
    %201 = vmatprep.subr.mxu0 0.0
    %202 = vmatpush1.xpose.msra.mxu0 0.0
    %203 = vmatprep.subr.mxu0 0.0
    %204 = vmatpush1.xpose.msra.mxu0 0.0
    %205 = vmatprep.subr.mxu0 0.0
    %206 = vmatpush1.xpose.msra.mxu0 0.0
    %207 = vmatprep.subr.mxu0 0.0
    %208 = vmatpush1.xpose.msra.mxu0 0.0
    %209 = vmatprep.subr.mxu0 0.0
    %210 = vmatpush1.xpose.msra.mxu0 0.0
    %211 = vmatprep.subr.mxu0 0.0
    %212 = vmatpush1.xpose.msra.mxu0 0.0
    %213 = vmatprep.subr.mxu0 0.0
    %214 = vmatpush1.xpose.msra.mxu0 0.0
    %215 = vmatprep.subr.mxu0 0.0
    %216 = vmatpush1.xpose.msra.mxu0 0.0
    %217 = vmatprep.subr.mxu0 0.0
    %218 = vmatpush1.xpose.msra.mxu0 0.0
    %219 = vmatprep.subr.mxu0 0.0
    %220 = vmatpush1.xpose.msra.mxu0 0.0
    %221 = vmatprep.subr.mxu0 0.0
    %222 = vmatpush1.xpose.msra.mxu0 0.0
    %223 = vmatprep.subr.mxu0 0.0
    %224 = vmatpush1.xpose.msra.mxu0 0.0
    %225 = vmatprep.subr.mxu0 0.0
    %226 = vmatpush1.xpose.msra.mxu0 0.0
    %227 = vmatprep.mubr.f32.mxu0 0.0
    %228 = vmatmul.mubr.f32.gmra.mrb[0].mxu0 %v162
    %v229 = vpop.f32.mrb[0].mxu0
    %v230 = vadd.f32 0.0, %v229
    %v231 = vpop.f32.mrb[0].mxu0
    %232 = vdwg.mxu0
    %vm233 = vcmask 57344
    %234 = vst.msk [vmem:[#allocation12] sm:$0x1] %vm233, %v230
    %235 = vst.msk [vmem:[#allocation5] sm:$0x1] %vm233, %v230
    %v236 = vld [vmem:[#allocation2] sm:$0x1]
    %v237 = vsel %vm233, %v230, -inf
    %238 = vmax.xlane.f32.xlu0 %v237
    %v239 = vpop.xlane.xlu0 %238
    %v240 = vmax.f32 %v236, %v239
    %v241 = vsub.f32 %v236, %v240
    %v242 = vmul.f32 %v241, 1.442695
    %v243 = vpow.pop %v242
    %245 = vset.pattern.permute.xlu0 0
    %246 = vperm.xlu0 %245, %v240
    %v247 = vpop.permute.xlu0 %246
    %v249 = vlaneseq
    %v250 = vshrl.u32 %v249, 7
    %v251 = vsub.s32 0, %v250
    %v252 = vrot.slane %v247, %v251
    %v253 = vsub.f32 %v230, %v252
    %v254 = vmul.f32 %v253, 1.442695
    %v255 = vpow.pop %v254
    %v256 = vld [vmem:[#allocation3] sm:$0x1]
    %v257 = vmul.f32 %v243, %v256
    %v258 = vsel %vm233, %v255, 0.0
    %259 = vadd.xlane.f32.xlu0 %v258
    %v260 = vpop.xlane.xlu0 %259
    %v261 = vadd.f32 %v257, %v260
    %vm262 = vcmask 0
    %263 = vst.msk [vmem:[#allocation3] sm:$0x1] %vm262, %v261
    %v264 = vld [vmem:[#allocation4] sm:$0x3]
    %266 = vset.pattern.permute.xlu0 0
    %267 = vperm.xlu0 %266, %v243
    %v268 = vpop.permute.xlu0 %267
    %v270 = vlaneseq
    %v271 = vshrl.u32 %v270, 7
    %v272 = vsub.s32 0, %v271
    %v273 = vrot.slane %v268, %v272
    %v274 = vmul.f32 %v273, %v264
    %vm275 = vcmask 64512
    %v277 = vsel %vm275, %v255, 0
    %279 = vmatprep.subr.mxu0 %v58
    %280 = vmatpush1.msra.mxu0 %v57
    %281 = vmatprep.subr.mxu0 0.0
    %282 = vmatpush1.msra.mxu0 0.0
    %283 = vmatprep.subr.mxu0 0.0
    %284 = vmatpush1.msra.mxu0 0.0
    %285 = vmatprep.subr.mxu0 0.0
    %286 = vmatpush1.msra.mxu0 0.0
    %287 = vmatprep.subr.mxu0 0.0
    %288 = vmatpush1.msra.mxu0 0.0
    %289 = vmatprep.subr.mxu0 0.0
    %290 = vmatpush1.msra.mxu0 0.0
    %291 = vmatprep.subr.mxu0 0.0
    %292 = vmatpush1.msra.mxu0 0.0
    %293 = vmatprep.subr.mxu0 0.0
    %294 = vmatpush1.msra.mxu0 0.0
    %295 = vmatprep.subr.mxu0 0.0
    %296 = vmatpush1.msra.mxu0 0.0
    %297 = vmatprep.subr.mxu0 0.0
    %298 = vmatpush1.msra.mxu0 0.0
    %299 = vmatprep.subr.mxu0 0.0
    %300 = vmatpush1.msra.mxu0 0.0
    %301 = vmatprep.subr.mxu0 0.0
    %302 = vmatpush1.msra.mxu0 0.0
    %303 = vmatprep.subr.mxu0 0.0
    %304 = vmatpush1.msra.mxu0 0.0
    %305 = vmatprep.subr.mxu0 0.0
    %306 = vmatpush1.msra.mxu0 0.0
    %307 = vmatprep.subr.mxu0 0.0
    %308 = vmatpush1.msra.mxu0 0.0
    %309 = vmatprep.subr.mxu0 0.0
    %310 = vmatpush1.msra.mxu0 0.0
    %311 = vmatprep.subr.mxu0 0.0
    %312 = vmatpush1.msra.mxu0 0.0
    %313 = vmatprep.subr.mxu0 0.0
    %314 = vmatpush1.msra.mxu0 0.0
    %315 = vmatprep.subr.mxu0 0.0
    %316 = vmatpush1.msra.mxu0 0.0
    %317 = vmatprep.subr.mxu0 0.0
    %318 = vmatpush1.msra.mxu0 0.0
    %319 = vmatprep.subr.mxu0 0.0
    %320 = vmatpush1.msra.mxu0 0.0
    %321 = vmatprep.subr.mxu0 0.0
    %322 = vmatpush1.msra.mxu0 0.0
    %323 = vmatprep.subr.mxu0 0.0
    %324 = vmatpush1.msra.mxu0 0.0
    %325 = vmatprep.subr.mxu0 0.0
    %326 = vmatpush1.msra.mxu0 0.0
    %327 = vmatprep.subr.mxu0 0.0
    %328 = vmatpush1.msra.mxu0 0.0
    %329 = vmatprep.subr.mxu0 0.0
    %330 = vmatpush1.msra.mxu0 0.0
    %331 = vmatprep.subr.mxu0 0.0
    %332 = vmatpush1.msra.mxu0 0.0
    %333 = vmatprep.subr.mxu0 0.0
    %334 = vmatpush1.msra.mxu0 0.0
    %335 = vmatprep.subr.mxu0 0.0
    %336 = vmatpush1.msra.mxu0 0.0
    %337 = vmatprep.subr.mxu0 0.0
    %338 = vmatpush1.msra.mxu0 0.0
    %339 = vmatprep.subr.mxu0 0.0
    %340 = vmatpush1.msra.mxu0 0.0
    %341 = vmatprep.subr.mxu0 0.0
    %342 = vmatpush1.msra.mxu0 0.0
    %343 = vmatprep.mubr.f32.mxu0 0.0
    %344 = vmatmul.mubr.f32.gmra.mrb[0].mxu0 %v277
    %v345 = vpop.f32.mrb[0].mxu0
    %v346 = vadd.f32 0.0, %v345
    %v347 = vpop.f32.mrb[0].mxu0
    %v348 = vadd.f32 0.0, %v347
    %349 = vdwg.mxu0
    %v352 = vcombine.low %v346, %v348
    %v354 = vunpack.c.l.s4 1966171168
    %v355 = vunpack.c.0.s8 %v354
    %v356 = vlaneseq
    %v357 = vshrl.u32 %v356, 7
    %v358 = vsub.s32 %v355, %v357
    %v359 = vrot.slane %v352, %v358
    %v361 = vunpack.c.l.s4 1966171168
    %v362 = vunpack.c.0.s8 %v361
    %v363 = vlaneseq
    %v364 = vshrl.u32 %v363, 7
    %v365 = vsub.s32 %v362, %v364
    %v366 = vrot.slane %v359, %v365
    %v368 = vadd.f32 %v274, %v366
    %v369 = vlaneseq
    %vm370 = vcmp.ge.s32.totalorder %v369, 0
    %vm371 = vcmp.lt.s32.totalorder %v369, 256
    %vm372 = vmand %vm370, %vm371
    %373 = vst.msk [vmem:[#allocation4] sm:$0x3] %vm372, %v368
    %374 = vst.msk [vmem:[#allocation2] sm:$0x1] %vm262, %v240
    // Predicated region
    $region26: #{tpu_custom_call.1} parent=1 // pred_check
      %p375 = pneg %p45
    $region27: #{tpu_custom_call.1} parent=1 // pred_check_branch
      %377 = sbr.rel (%p375) target = $region29
    $region28: #{tpu_custom_call.1} parent=1 // pred_region
      %v378 = vld [vmem:[#allocation3] sm:$0x1]
      %v379 = vld [vmem:[#allocation4] sm:$0x3]
      %381 = vset.pattern.permute.xlu0 0
      %382 = vperm.xlu0 %381, %v378
      %v383 = vpop.permute.xlu0 %382
      %v385 = vlaneseq
      %v386 = vshrl.u32 %v385, 7
      %v387 = vsub.s32 0, %v386
      %v388 = vrot.slane %v383, %v387
      %v389 = vrcp.pop %v388
      %v390 = vmul.f32 %v379, %v389
      %391 = vst.msk [vmem:[#allocation11] sm:$0x3] %vm372, %v390
      %v392 = vld [vmem:[#allocation5] sm:$0x1]
      %v393 = vld [vmem:[#allocation2] sm:$0x1]
      %395 = vset.pattern.permute.xlu0 0
      %396 = vperm.xlu0 %395, %v393
      %v397 = vpop.permute.xlu0 %396
      %v399 = vlaneseq
      %v400 = vshrl.u32 %v399, 7
      %v401 = vsub.s32 0, %v400
      %v402 = vrot.slane %v397, %v401
      %v403 = vsub.f32 %v392, %v402
      %v404 = vmul.f32 %v403, 1.442695
      %v405 = vpow.pop %v404
      %v406 = vmul.f32 %v405, %v389
      %407 = vst.msk [vmem:[#allocation14] sm:$0x1] %vm233, %v406
    $region29: #{tpu_custom_call.1} parent=1 // pred_fallthru
      _
    // Predicated region
    $region30: #{tpu_custom_call.1} parent=1 // pred_check
      _
    $region31: #{tpu_custom_call.1} parent=1 // pred_check_branch
      %409 = sbr.rel (0) target = $region33
    $region32: #{tpu_custom_call.1} parent=1 // pred_region
      %s411 = ssub.s32 32, 32
      %412 = vsyncadd [#allocation8], %s411
      %s414 = sshll.u32 [#allocation11], 4
      %s415 = int_to_ptr.vmem [resolvable:$true] %s414
      %417 = dma.vmem_to_hbm [thread:$0]  %s415, 32, %s3, [#allocation8]
    $region33: #{tpu_custom_call.1} parent=1 // pred_fallthru
      _
    // Predicated region
    $region34: #{tpu_custom_call.1} parent=1 // pred_check
      _
    $region35: #{tpu_custom_call.1} parent=1 // pred_check_branch
      %419 = sbr.rel (0) target = $region37
    $region36: #{tpu_custom_call.1} parent=1 // pred_region
      %s421 = ssub.s32 16, 16
      %422 = vsyncadd [#allocation13], %s421
      %s424 = sshll.u32 [#allocation12], 4
      %s425 = int_to_ptr.vmem [resolvable:$true] %s424
      %427 = dma.vmem_to_hbm [thread:$0]  %s425, 16, %s4, [#allocation13]
    $region37: #{tpu_custom_call.1} parent=1 // pred_fallthru
      _
    // Predicated region
    $region38: #{tpu_custom_call.1} parent=1 // pred_check
      _
    $region39: #{tpu_custom_call.1} parent=1 // pred_check_branch
      %429 = sbr.rel (0) target = $region41
    $region40: #{tpu_custom_call.1} parent=1 // pred_region
      %s431 = ssub.s32 16, 16
      %432 = vsyncadd [#allocation13], %s431
      %s434 = sshll.u32 [#allocation14], 4
      %s435 = int_to_ptr.vmem [resolvable:$true] %s434
      %437 = dma.vmem_to_hbm [thread:$0]  %s435, 16, %s5, [#allocation13]
    $region41: #{tpu_custom_call.1} parent=1 // pred_fallthru
      _
    // Predicated region
    $region42: #{tpu_custom_call.1} parent=1 // pred_check
      _
    $region43: #{tpu_custom_call.1} parent=1 // pred_check_branch
      %439 = sbr.rel (0) target = $region45
    $region44: #{tpu_custom_call.1} parent=1 // pred_region
      %440 = dma.done [#allocation8], 32
    $region45: #{tpu_custom_call.1} parent=1 // pred_fallthru
      _
    // Predicated region
    $region46: #{tpu_custom_call.1} parent=1 // pred_check
      _
    $region47: #{tpu_custom_call.1} parent=1 // pred_check_branch
      %442 = sbr.rel (0) target = $region49
    $region48: #{tpu_custom_call.1} parent=1 // pred_region
      %443 = dma.done [#allocation13], 16
    $region49: #{tpu_custom_call.1} parent=1 // pred_fallthru
      _
    // Predicated region
    $region50: #{tpu_custom_call.1} parent=1 // pred_check
      _
    $region51: #{tpu_custom_call.1} parent=1 // pred_check_branch
      %445 = sbr.rel (0) target = $region53
    $region52: #{tpu_custom_call.1} parent=1 // pred_region
      %446 = dma.done [#allocation13], 16
    $region53: #{tpu_custom_call.1} parent=1 // pred_fallthru
      _
    %447 = vsyncpa [#allocation7], 1
    %448 = vsyncpa [#allocation10], 1
    %449 = vsyncpa [#allocation8], 1
    %450 = vsyncpa [#allocation13], 1

</llo_original>
